<compile_context>
chip_gen: v7x
topology: tpu7x:2x2x1
jax: 0.10.0
libtpu: 0.0.40
codegen_flags: <defaults>
</compile_context>

<pallas_src>
import functools

import jax
import jax.numpy as jnp
from jax.experimental import pallas as pl
from jax.experimental.pallas import tpu as pltpu


_EPS = 1e-5
_NEG_SLOPE = 0.2


def _leaky(y):
    return jnp.where(y >= 0.0, y, _NEG_SLOPE * y)


@functools.lru_cache(maxsize=None)
def _roll_is_jnp_like():
    """One-time probe of pltpu.roll's rotation direction.

    Guards the tap shifts against the hardware rotate sign convention:
    jnp.roll-like means out[i] = in[i - shift].
    """
    def k(x_ref, o_ref):
        o_ref[...] = pltpu.roll(x_ref[...], shift=1, axis=1)

    x = jnp.tile(jnp.arange(128, dtype=jnp.float32)[None, :], (8, 1))
    vmem = pl.BlockSpec(memory_space=pltpu.MemorySpace.VMEM)
    y = pl.pallas_call(k, out_shape=jax.ShapeDtypeStruct((8, 128), jnp.float32),
                       in_specs=[vmem], out_specs=vmem)(x)
    return bool(y[0, 1] == 0.0)


def _tap_stack(xf, masks, img_w, roll_sign):
    """9-tap im2col stack of a (C, N*S) map using XLU lane rotations.

    Tap order is (dy, dx) for dy in (-1,0,1), dx in (-1,0,1).  `masks` zeroes
    every tap whose source pixel is outside its own image, which also makes
    the circular rotation exact across sample boundaries (batch is folded
    onto the lane axis).
    """
    _, ns = xf.shape
    taps = []
    t = 0
    for dy in (-1, 0, 1):
        for dx in (-1, 0, 1):
            if dy == 0 and dx == 0:
                taps.append(xf)                       # centre tap: mask == 1
            else:
                off = dy * img_w + dx                 # want out[p] = xf[p + off]
                shift = (roll_sign * off) % ns
                taps.append(pltpu.roll(xf, shift=shift, axis=1) * masks[t:t + 1, :])
            t += 1
    return jnp.concatenate(taps, axis=0)              # (9*C, N*S)


def _res_up_block_kernel(x_ref, wa_ref, wb_ref, pv_ref, m_ref, o_ref, *,
                         img_w, c_out, roll_sign):
    ns = x_ref.shape[1]
    masks = m_ref[...]                                # (9, N*S)
    pv = pv_ref[...]                                  # (Cout, 8) packed params
    bs, g1, be1 = pv[:, 0:1], pv[:, 1:2], pv[:, 2:3]
    g2, be2 = pv[:, 3:4], pv[:, 4:5]

    x = x_ref[...].astype(jnp.float32)                # (Cp, N*S)

    # Stage 1: conv1 + upsample-folded skip conv share one im2col stack/matmul.
    a = jnp.dot(wa_ref[...], _tap_stack(x, masks, img_w, roll_sign),
                preferred_element_type=jnp.float32)   # (5*Cout, N*S)
    c1 = a[:c_out, :]

    # bn1 (training semantics: biased batch variance) folded into scale/shift.
    inv1 = 1.0 / ns
    m1 = jnp.sum(c1, axis=1, keepdims=True) * inv1
    v1 = jnp.sum(c1 * c1, axis=1, keepdims=True) * inv1 - m1 * m1
    sc1 = jax.lax.rsqrt(v1 + _EPS) * g1
    z1 = _leaky(c1 * sc1 + (be1 - m1 * sc1))          # (Cout, N*S)

    # Stage 2: conv2 with the 2x upsample folded into 4 output parities.
    b = jnp.dot(wb_ref[...], _tap_stack(z1, masks, img_w, roll_sign),
                preferred_element_type=jnp.float32)   # (4*Cout, N*S)

    # bn2 statistics over all four parity maps (= all N*2H*2W output pixels).
    inv2 = 1.0 / (4 * ns)
    rs = jnp.sum(b, axis=1, keepdims=True)            # (4*Cout, 1)
    rq = jnp.sum(b * b, axis=1, keepdims=True)
    sm = rs[0:c_out] + rs[c_out:2 * c_out] + rs[2 * c_out:3 * c_out] + rs[3 * c_out:]
    sq = rq[0:c_out] + rq[c_out:2 * c_out] + rq[2 * c_out:3 * c_out] + rq[3 * c_out:]
    m2 = sm * inv2
    v2 = sq * inv2 - m2 * m2
    sc2 = jax.lax.rsqrt(v2 + _EPS) * g2
    sh2 = (be2 - m2 * sc2) + bs                       # bn2 shift + skip-conv bias

    sc2t = jnp.concatenate([sc2] * 4, axis=0)         # tile per-channel over parities
    sh2t = jnp.concatenate([sh2] * 4, axis=0)

    # leaky(bn2(conv2) + skip): one lane-dense (4*Cout, N*S) store.
    o_ref[...] = _leaky(b * sc2t + a[c_out:, :] + sh2t).astype(o_ref.dtype)


# --------------------------------------------------------------------------
# Host-side wrapper (only tiny constant / layout work outside the kernel).
# --------------------------------------------------------------------------
def _tap_masks(h, w, n):
    """(9, n*h*w) f32 source-validity masks, tap order (dy,dx), tiled per sample."""
    row = jnp.arange(h * w, dtype=jnp.int32) // w
    col = jnp.arange(h * w, dtype=jnp.int32) % w
    masks = []
    for dy in (-1, 0, 1):
        for dx in (-1, 0, 1):
            m = jnp.ones((h * w,), jnp.float32)
            if dy == -1:
                m = m * (row >= 1)
            elif dy == 1:
                m = m * (row <= h - 2)
            if dx == -1:
                m = m * (col >= 1)
            elif dx == 1:
                m = m * (col <= w - 2)
            masks.append(m)
    return jnp.tile(jnp.stack(masks, axis=0), (1, n))


def _conv1_weights(w_hwio, c_pad):
    """HWIO (3,3,Cin,Cout) -> (Cout, 9*c_pad), columns ordered (dy, dx, ci)."""
    kh, kw, cin, cout = w_hwio.shape
    w = jnp.pad(w_hwio, ((0, 0), (0, 0), (0, c_pad - cin), (0, 0)))
    return w.reshape(kh * kw * c_pad, cout).T


def _upconv_weights(w_hwio, c_pad):
    """Fold nearest-2x upsample into a 3x3 conv.

    For output parity (py,px) the effective kernel is a 2x2 stencil on the
    low-res map; it is scattered into the shared 9-tap (dy,dx) layout so all
    four parities reuse one im2col stack.  Returns (4*Cout, 9*c_pad), row
    blocks ordered (py,px) = (0,0),(0,1),(1,0),(1,1).
    """
    kh, kw, cin, cout = w_hwio.shape
    w = jnp.pad(w_hwio, ((0, 0), (0, 0), (0, c_pad - cin), (0, 0)))
    blocks = []
    for py in range(2):
        for px in range(2):
            acc = jnp.zeros((3, 3, c_pad, cout), w.dtype)
            for ky in range(3):
                for kx in range(3):
                    dy = (py + ky - 1) // 2       # source offset in the low-res map
                    dx = (px + kx - 1) // 2
                    acc = acc.at[dy + 1, dx + 1].add(w[ky, kx])
            blocks.append(acc.reshape(9 * c_pad, cout).T)
    return jnp.concatenate(blocks, axis=0)


def res_up_block(x_nchw, p):
    """ResUpBlock forward: NCHW in -> NCHW out (matches the PyTorch module)."""
    N, Cin, H, W = x_nchw.shape
    Cout = p["w1"].shape[-1]
    S = H * W
    NS = N * S
    Cp = -(-Cin // 8) * 8                          # pad input channels to a sublane tile

    # (N,Cin,H,W) -> channels-major (Cp, N*S): batch folded onto the lane axis.
    x_cm = jnp.transpose(x_nchw, (1, 0, 2, 3)).reshape(Cin, NS)
    x_cm = jnp.pad(x_cm, ((0, Cp - Cin), (0, 0)))

    # Stage-1 weights: [conv1 ; upsample-folded skip_conv]; stage-2: folded conv2.
    wa = jnp.concatenate([_conv1_weights(p["w1"], Cp),
                          _upconv_weights(p["ws"], Cp)], axis=0)   # (5*Cout, 9*Cp)
    wb = _upconv_weights(p["w2"], Cout)                            # (4*Cout, 9*Cout)

    # Pack the five per-channel vectors into a single (Cout, 8) operand.
    zeros = jnp.zeros_like(p["bs"])
    pv = jnp.stack([p["bs"], p["g1"], p["be1"], p["g2"], p["be2"],
                    zeros, zeros, zeros], axis=1)

    masks = _tap_masks(H, W, N)                                    # (9, N*S)

    roll_sign = -1 if _roll_is_jnp_like() else 1

    vmem = pl.BlockSpec(memory_space=pltpu.MemorySpace.VMEM)
    out = pl.pallas_call(
        functools.partial(_res_up_block_kernel, img_w=W, c_out=Cout,
                          roll_sign=roll_sign),
        out_shape=jax.ShapeDtypeStruct((4 * Cout, NS), x_nchw.dtype),
        in_specs=[vmem] * 5,
        out_specs=vmem,
        compiler_params=pltpu.CompilerParams(vmem_limit_bytes=32 * 1024 * 1024),
    )(x_cm, wa, wb, pv, masks)

    # (parity, parity, Cout, N, H, W) -> NCHW: interleave the 2x2 parities
    # with one cheap XLA reshape/transpose (64 KB at this size).
    out = out.reshape(2, 2, Cout, N, H, W).transpose(3, 2, 4, 0, 5, 1)
    return out.reshape(N, Cout, 2 * H, 2 * W)


# --------------------------------------------------------------------------
# Pure-JAX reference (same math, no Pallas) for verification.
# Note: the reference includes the conv1/conv2 biases; the kernel omits them
# because training-mode BatchNorm cancels them exactly.
# --------------------------------------------------------------------------
def _upsample2x_ref(x_nhwc):
    x = jnp.repeat(x_nhwc, 2, axis=1)
    return jnp.repeat(x, 2, axis=2)


def _conv_ref(x, w_hwio, b):
    out = jax.lax.conv_general_dilated(
        x, w_hwio, window_strides=(1, 1), padding="SAME",
        dimension_numbers=("NHWC", "HWIO", "NHWC"))
    return out + b


def _bn_ref(x, g, be):
    mean = x.mean(axis=(0, 1, 2), keepdims=True)
    var = ((x - mean) ** 2).mean(axis=(0, 1, 2), keepdims=True)
    return (x - mean) * jax.lax.rsqrt(var + _EPS) * g + be


def res_up_block_ref(x_nchw, p):
    x = jnp.transpose(x_nchw, (0, 2, 3, 1))
    skip = _conv_ref(_upsample2x_ref(x), p["ws"], p["bs"])
    z = _conv_ref(x, p["w1"], p["b1"])
    z = _leaky(_bn_ref(z, p["g1"], p["be1"]))
    z = _upsample2x_ref(z)
    z = _conv_ref(z, p["w2"], p["b2"])
    z = _leaky(_bn_ref(z, p["g2"], p["be2"]) + skip)
    return jnp.transpose(z, (0, 3, 1, 2))


def _oihw_to_hwio(w):
    return jnp.transpose(w, (2, 3, 1, 0))


if __name__ == "__main__":
    N, Cin, Cout, H, W = 2, 4, 8, 16, 16

    key = jax.random.PRNGKey(0)
    ks = jax.random.split(key, 7)
    x = jax.random.normal(ks[0], (N, Cin, H, W), jnp.float32)

    # Deterministic synthetic parameters (PyTorch shapes, converted to HWIO).
    params = {
        "w1": _oihw_to_hwio(0.1 * jax.random.normal(ks[1], (Cout, Cin, 3, 3), jnp.float32)),
        "b1": 0.1 * jax.random.normal(ks[2], (Cout,), jnp.float32),
        "w2": _oihw_to_hwio(0.1 * jax.random.normal(ks[3], (Cout, Cout, 3, 3), jnp.float32)),
        "b2": 0.1 * jax.random.normal(ks[4], (Cout,), jnp.float32),
        "ws": _oihw_to_hwio(0.1 * jax.random.normal(ks[5], (Cout, Cin, 3, 3), jnp.float32)),
        "bs": 0.1 * jax.random.normal(ks[6], (Cout,), jnp.float32),
        "g1": jnp.ones((Cout,), jnp.float32),    # fresh BatchNorm2d: weight=1
        "be1": jnp.zeros((Cout,), jnp.float32),  # fresh BatchNorm2d: bias=0
        "g2": jnp.ones((Cout,), jnp.float32),
        "be2": jnp.zeros((Cout,), jnp.float32),
    }

    out = jax.block_until_ready(res_up_block(x, params))
    ref = jax.block_until_ready(res_up_block_ref(x, params))

    assert out.shape == (N, Cout, 2 * H, 2 * W), out.shape
    err = float(jnp.max(jnp.abs(out - ref)))
    assert jnp.allclose(out, ref, atol=1e-4, rtol=1e-4), err

    print("KERNEL_OK")
</pallas_src>

<mosaic_0001>
module attributes {stable_mosaic.version = 11 : i64} {
  func.func @k(%arg0: memref<8x128xf32, #tpu.memory_space<vmem>>, %arg1: memref<8x128xf32, #tpu.memory_space<vmem>>) attributes {dimension_semantics = [], scalar_prefetch = 0 : i64, scratch_operands = 0 : i64, tpu.core_type = #tpu.core_type<tc>} {
    %c0 = arith.constant 0 : index
    %c0_0 = arith.constant 0 : index
    %0 = vector.load %arg0[%c0, %c0_0] : memref<8x128xf32, #tpu.memory_space<vmem>>, vector<8x128xf32>
    %c1_i32 = arith.constant 1 : i32
    %1 = tpu.dynamic_rotate %0 by %c1_i32 dim 1 : vector<8x128xf32>, i32 -> vector<8x128xf32>
    %c0_1 = arith.constant 0 : index
    %c0_2 = arith.constant 0 : index
    %2 = vector.load %arg1[%c0_1, %c0_2] : memref<8x128xf32, #tpu.memory_space<vmem>>, vector<8x128xf32>
    tpu.vector_store %arg1[%c0_1, %c0_2], %1 {strides = array<i32>} : memref<8x128xf32, #tpu.memory_space<vmem>>, vector<8x128xf32>,
    return
  }
}

</mosaic_0001>

<llo_original>
// kernel: tpu_custom_call.1
$region0: #{tpu_custom_call.1}
  #allocation0 [shape = 'u32[]', space=smem, size = 0x4, offset = 0x4, fixed_abs, tag = 'smem constant byte address 0x4 - core index']
  #allocation1 [shape = 'u32[144,128]{1,0:T(1,128)}', space=vmem, size = 0x12000, scoped, tag = 'internal scratch']
  %s0 = inlined_call_operand.hbm [shape: f32[8,128], index: 0, kind: input, shape index: {}]
  %s1 = inlined_call_operand.hbm [shape: f32[8,128], index: 1, kind: output, shape index: {}]
  %s2 = sld [smem:[#allocation0]]
  $region18: #{tpu_custom_call.1} parent=0
    _
  %s4 = ssub.s32 1, %s2
  %s5 = scalar_select 0, %s4, %s2
  $region1: #{tpu_custom_call.1} parent=0
    #allocation2 [shape = 'u8[4096]{0}', space=vmem, size = 0x1000, scoped, tag = 'input window, operand 0, single buffered']
    #allocation3 [shape = 's32[1]{0}', space=sflag, size = 0x4, scoped, tag = 'scoped memory for tpu_custom_call.1']
    #allocation4 [shape = 's32[1]{0}', space=sflag, size = 0x4, scoped, tag = 'scoped memory for tpu_custom_call.1']
    #allocation5 [shape = 'u8[4096]{0}', space=vmem, size = 0x1000, scoped, tag = 'output window, operand 0, single buffered']
    %6 = vsyncpa [#allocation3], 0
    %7 = vsyncpa [#allocation4], 0
    // Predicated region
    $region2: #{tpu_custom_call.1} parent=1 // pred_check
      _
    $region3: #{tpu_custom_call.1} parent=1 // pred_check_branch
      %9 = sbr.rel (0) target = $region5
    $region4: #{tpu_custom_call.1} parent=1 // pred_region
      %s11 = ssub.s32 128, 128
      %12 = vsyncadd [#allocation3], %s11
      %s14 = sshll.u32 [#allocation2], 4
      %s15 = int_to_ptr.vmem [resolvable:$true] %s14
      %17 = dma.hbm_to_vmem [thread:$0]  %s0, 128, %s15, [#allocation3]
    $region5: #{tpu_custom_call.1} parent=1 // pred_fallthru
      _
    // Predicated region
    $region6: #{tpu_custom_call.1} parent=1 // pred_check
      _
    $region7: #{tpu_custom_call.1} parent=1 // pred_check_branch
      %19 = sbr.rel (0) target = $region9
    $region8: #{tpu_custom_call.1} parent=1 // pred_region
      %20 = dma.done [#allocation3], 128
    $region9: #{tpu_custom_call.1} parent=1 // pred_fallthru
      _
    %v21 = vld [vmem:[#allocation2] sm:$0xff]
    %22 = vrot.lane.b32.xlu0 %v21, 1
    %v23 = vpop.permute.xlu0 %22
    %24 = vst [vmem:[#allocation5] sm:$0xff] %v23
    // Predicated region
    $region10: #{tpu_custom_call.1} parent=1 // pred_check
      _
    $region11: #{tpu_custom_call.1} parent=1 // pred_check_branch
      %26 = sbr.rel (0) target = $region13
    $region12: #{tpu_custom_call.1} parent=1 // pred_region
      %s28 = ssub.s32 128, 128
      %29 = vsyncadd [#allocation4], %s28
      %s31 = sshll.u32 [#allocation5], 4
      %s32 = int_to_ptr.vmem [resolvable:$true] %s31
      %34 = dma.vmem_to_hbm [thread:$0]  %s32, 128, %s1, [#allocation4]
    $region13: #{tpu_custom_call.1} parent=1 // pred_fallthru
      _
    // Predicated region
    $region14: #{tpu_custom_call.1} parent=1 // pred_check
      _
    $region15: #{tpu_custom_call.1} parent=1 // pred_check_branch
      %36 = sbr.rel (0) target = $region17
    $region16: #{tpu_custom_call.1} parent=1 // pred_region
      %37 = dma.done [#allocation4], 128
    $region17: #{tpu_custom_call.1} parent=1 // pred_fallthru
      _
    %38 = vsyncpa [#allocation3], 1
    %39 = vsyncpa [#allocation4], 1

</llo_original>
